<compile_context>
chip_gen: v7x
topology: tpu7x:2x2x1
jax: 0.10.0
libtpu: 0.0.40
codegen_flags: <defaults>
</compile_context>

<pallas_src>
import functools

import jax
import jax.numpy as jnp
from jax.experimental import pallas as pl
from jax.experimental.pallas import tpu as pltpu


def _cdiv(a: int, b: int) -> int:
    return -(-a // b)


def _round_up(a: int, b: int) -> int:
    return _cdiv(a, b) * b


def _tpu_vmem_capacity_bytes(default: int = 128 << 20) -> int:
    """Trace-time VMEM capacity query with a conservative fallback."""
    try:
        info = pltpu.get_tpu_info()
    except Exception:  # no TPU info available (e.g. interpret mode)
        return default
    for attr in ("vmem_capacity_bytes", "vmem_size_bytes", "vmem_bytes"):
        cap = getattr(info, attr, None)
        if cap:
            return int(cap)
    return default


def _pick_plane_batch(nc, img_size, width, itemsize, full_row, budget_bytes,
                      two_cores):
    """Largest plane-batch B whose *tile-padded* VMEM footprint
    (double-buffered output block + optional full-row scratch) fits the
    budget.  On two-TensorCore parts the grid is forced to >= 2 steps and
    nudged toward an even step count."""
    sublane = max(8, 32 // itemsize)          # 8 f32, 16 bf16, 32 int8/fp8
    pad_rows = _round_up(img_size, sublane)
    out_plane = pad_rows * _round_up(img_size, 128) * itemsize
    per_plane = 2 * out_plane                 # double-buffered output block
    if full_row:
        # single-buffered full-width row scratch
        per_plane += pad_rows * _round_up(width, 128) * itemsize

    cap = max(1, budget_bytes // per_plane)
    b = max(1, min(cap, nc))

    if two_cores and nc >= 2:
        b = min(b, _cdiv(nc, 2))              # at least 2 grid steps
        g = _cdiv(nc, b)
        if g % 2 == 1:                        # try to even out TC workloads
            for g2 in (g + 1, g + 2, g + 3):
                b2 = max(1, _cdiv(nc, g2))
                if _cdiv(nc, b2) % 2 == 0:
                    b = b2
                    break
    return b


def _trim_kernel(img_size, plane_batch, tail, full_row, x_hbm, o_ref, *scratch):
    """One grid step: DMA the cropped window of up to `plane_batch`
    consecutive (H, W) planes from HBM into the auto-pipelined output block.

    full_row=True : DMA full-width rows into a VMEM scratch (long contiguous
                    HBM bursts), column-crop in VMEM.
    full_row=False: strided DMA of the cropped window straight into o_ref.
    tail != 0     : the last grid step only covers `tail` planes (static).
    """
    if full_row:
        row_buf, copy_sem = scratch
    else:
        (copy_sem,) = scratch

    i = pl.program_id(0)
    start = pl.multiple_of(i * plane_batch, plane_batch)

    def copy_planes(count):  # `count` is a static Python int
        if full_row:
            src = x_hbm.at[pl.ds(start, count), :img_size, :]
            dst = row_buf.at[:count]
            cp = pltpu.make_async_copy(src, dst, copy_sem)
            cp.start()
            cp.wait()
            o_ref[:count] = row_buf[:count, :, :img_size]
        else:
            src = x_hbm.at[pl.ds(start, count), :img_size, :img_size]
            dst = o_ref.at[:count]
            cp = pltpu.make_async_copy(src, dst, copy_sem)
            cp.start()
            cp.wait()

    if tail == 0:
        copy_planes(plane_batch)
    else:
        last = pl.num_programs(0) - 1

        @pl.when(i < last)
        def _():
            copy_planes(plane_batch)

        @pl.when(i == last)
        def _():
            copy_planes(tail)


def trim_pixels(x: jax.Array, img_size: int) -> jax.Array:
    """Pallas equivalent of TrimPixels.forward for NCHW input."""
    N, C, H, W = x.shape
    assert img_size <= H and img_size <= W, "img_size must fit inside input"

    nc = N * C
    x_flat = x.reshape(nc, H, W)  # free: NCHW is contiguous over (N*C, H, W)
    itemsize = x.dtype.itemsize

    # Short cropped rows -> read full-width rows (contiguous) and crop in VMEM.
    full_row = img_size * itemsize < 512

    vmem_cap = _tpu_vmem_capacity_bytes()
    two_cores = vmem_cap <= (64 << 20)        # v7x-like: half VMEM, 2 TCs
    if two_cores:
        budget_bytes, vmem_limit = 22 << 20, 32 << 20
    else:                                     # v5e / v6e: 128 MiB physical
        budget_bytes, vmem_limit = 64 << 20, 96 << 20

    plane_batch = _pick_plane_batch(nc, img_size, W, itemsize, full_row,
                                    budget_bytes, two_cores)
    grid = _cdiv(nc, plane_batch)
    tail = nc % plane_batch                   # 0 => every block is full

    scratch_shapes = []
    if full_row:
        scratch_shapes.append(pltpu.VMEM((plane_batch, img_size, W), x.dtype))
    scratch_shapes.append(pltpu.SemaphoreType.DMA(()))

    bytes_read = nc * img_size * (W if full_row else img_size) * itemsize
    bytes_written = nc * img_size * img_size * itemsize

    out_flat = pl.pallas_call(
        functools.partial(_trim_kernel, img_size, plane_batch, tail, full_row),
        out_shape=jax.ShapeDtypeStruct((nc, img_size, img_size), x.dtype),
        grid_spec=pltpu.PrefetchScalarGridSpec(
            num_scalar_prefetch=0,
            grid=(grid,),
            in_specs=[
                # Raw HBM ref: the crop / row read is a manual DMA, so no
                # BlockSpec alignment constraints and no over-read of the
                # bottom rows.
                pl.BlockSpec(memory_space=pl.ANY),
            ],
            out_specs=pl.BlockSpec(
                # Last two dims equal the full output dims -> always a legal
                # block regardless of img_size alignment; the partial last
                # block (tail) is clipped on writeback.
                (plane_batch, img_size, img_size),
                lambda i: (i, 0, 0),
            ),
            scratch_shapes=scratch_shapes,
        ),
        compiler_params=pltpu.CompilerParams(
            dimension_semantics=("parallel",),
            vmem_limit_bytes=vmem_limit,
        ),
        cost_estimate=pl.CostEstimate(
            flops=0,
            transcendentals=0,
            bytes_accessed=int(bytes_read + bytes_written),
        ),
    )(x_flat)

    return out_flat.reshape(N, C, img_size, img_size)


if __name__ == "__main__":
    key = jax.random.PRNGKey(0)
    # Small NCHW input consistent with the module (spatial >= img_size).
    N, C, H, W = 2, 4, 16, 16
    img_size = 12
    x = jax.random.normal(key, (N, C, H, W), dtype=jnp.float32)

    out = trim_pixels(x, img_size)
    out = jax.block_until_ready(out)

    # Reference check against plain slicing (same as the PyTorch forward).
    ref = x[:, :, :img_size, :img_size]
    assert out.shape == (N, C, img_size, img_size)
    assert jnp.array_equal(out, ref)

    print("KERNEL_OK")
</pallas_src>

<mosaic_0001>
module attributes {stable_mosaic.version = 11 : i64} {
  func.func @_trim_kernel(%arg0: i32, %arg1: memref<8x16x16xf32, #tpu.memory_space<any>>, %arg2: memref<8x12x12xf32, #tpu.memory_space<vmem>>, %arg3: memref<8x12x16xf32, #tpu.memory_space<vmem>>, %arg4: memref<!tpu.dma_semaphore, #tpu.memory_space<semaphore_mem>>) attributes {dimension_semantics = [#tpu.dimension_semantics<parallel>], iteration_bounds = array<i64: 1>, scalar_prefetch = 0 : i64, scratch_operands = 2 : i64, tpu.core_type = #tpu.core_type<tc>, window_params = [{}, {transform_indices = @transform_1, window_bounds = array<i64: 8, 12, 12>}]} {
    %c8_i32 = arith.constant 8 : i32
    %0 = arith.muli %arg0, %c8_i32 : i32
    %1 = tpu.assume_multiple %0, 8 : i32
    %c0_i32 = arith.constant 0 : i32
    %c0_i32_0 = arith.constant 0 : i32
    %2 = tpu.memref_slice %arg1[%1, %c0_i32, %c0_i32_0] : memref<8x16x16xf32, #tpu.memory_space<any>> -> memref<8x12x16xf32, #tpu.memory_space<any>>
    %c0_i32_1 = arith.constant 0 : i32
    %c0_i32_2 = arith.constant 0 : i32
    %c0_i32_3 = arith.constant 0 : i32
    %3 = tpu.memref_slice %arg3[%c0_i32_1, %c0_i32_2, %c0_i32_3] : memref<8x12x16xf32, #tpu.memory_space<vmem>> -> memref<8x12x16xf32, #tpu.memory_space<vmem>>
    tpu.enqueue_dma source(%2 : memref<8x12x16xf32, #tpu.memory_space<any>>) target(%3 : memref<8x12x16xf32, #tpu.memory_space<vmem>>) target_semaphore(%arg4 : memref<!tpu.dma_semaphore, #tpu.memory_space<semaphore_mem>>)
    %c0_i32_4 = arith.constant 0 : i32
    %c0_i32_5 = arith.constant 0 : i32
    %4 = tpu.memref_slice %arg1[%1, %c0_i32_4, %c0_i32_5] : memref<8x16x16xf32, #tpu.memory_space<any>> -> memref<8x12x16xf32, #tpu.memory_space<any>>
    %c0_i32_6 = arith.constant 0 : i32
    %c0_i32_7 = arith.constant 0 : i32
    %c0_i32_8 = arith.constant 0 : i32
    %5 = tpu.memref_slice %arg3[%c0_i32_6, %c0_i32_7, %c0_i32_8] : memref<8x12x16xf32, #tpu.memory_space<vmem>> -> memref<8x12x16xf32, #tpu.memory_space<vmem>>
    tpu.wait_dma2 semaphore(%arg4 : memref<!tpu.dma_semaphore, #tpu.memory_space<semaphore_mem>>) src(%4 : memref<8x12x16xf32, #tpu.memory_space<any>>) dst(%5 : memref<8x12x16xf32, #tpu.memory_space<vmem>>)
    %c0 = arith.constant 0 : index
    %c0_9 = arith.constant 0 : index
    %c0_10 = arith.constant 0 : index
    %6 = vector.load %arg3[%c0, %c0_9, %c0_10] : memref<8x12x16xf32, #tpu.memory_space<vmem>>, vector<8x12x12xf32>
    %c0_11 = arith.constant 0 : index
    %c0_12 = arith.constant 0 : index
    %c0_13 = arith.constant 0 : index
    %7 = vector.load %arg2[%c0_11, %c0_12, %c0_13] : memref<8x12x12xf32, #tpu.memory_space<vmem>>, vector<8x12x12xf32>
    tpu.vector_store %arg2[%c0_11, %c0_12, %c0_13], %6 {strides = array<i32>} : memref<8x12x12xf32, #tpu.memory_space<vmem>>, vector<8x12x12xf32>,
    return
  }
  func.func @transform_1(%arg0: i32) -> (i32, i32, i32) {
    %c0_i32 = arith.constant 0 : i32
    %c0_i32_0 = arith.constant 0 : i32
    %c0_i32_1 = arith.constant 0 : i32
    return %arg0, %c0_i32, %c0_i32_0 : i32, i32, i32
  }
}

</mosaic_0001>

<llo_original>
// kernel: tpu_custom_call.1
$region0: #{tpu_custom_call.1}
  #allocation0 [shape = 'u32[]', space=smem, size = 0x4, offset = 0x4, fixed_abs, tag = 'smem constant byte address 0x4 - core index']
  #allocation1 [shape = 'u32[144,128]{1,0:T(1,128)}', space=vmem, size = 0x12000, scoped, tag = 'internal scratch']
  #allocation2 [shape = 'f32[8,12,16]{2,1,0:T(8,128)}', space=vmem, size = 0x10000, scoped, tag = 'scratch operand']
  #allocation3 [shape = 's32[1]{0}', space=sflag, size = 0x4, scoped, tag = 'scratch operand']
  #allocation6 [shape = 's32[]', space=sflag, size = 0x4, offset = 0, fixed_abs, tag = 'sflag constant byte address 0x0 - dummy sync flag']
  %s0 = inlined_call_operand.hbm [shape: f32[8,16,16], index: 0, kind: input, shape index: {}]
  %s1 = inlined_call_operand.hbm [shape: f32[8,12,12], index: 1, kind: output, shape index: {}]
  %s2 = sld [smem:[#allocation0]]
  $region10: #{tpu_custom_call.1} parent=0
    _
  %s4 = ssub.s32 1, %s2
  %s5 = scalar_select 0, %s4, %s2
  $region1: #{tpu_custom_call.1} parent=0
    #allocation4 [shape = 'u8[65536]{0}', space=vmem, size = 0x10000, scoped, tag = 'output window, operand 0, single buffered']
    #allocation5 [shape = 's32[1]{0}', space=sflag, size = 0x4, scoped, tag = 'scoped memory for tpu_custom_call.1']
    %6 = vsyncpa [#allocation5], 0
    %s7 = smul.u32 0, 8
    %s8 = smul.u32 %s7, 16
    %s9 = smul.addr %s8, 16
    %s10 = scalar_lea.hbm %s0, %s9
    %s12 = sshll.u32 [#allocation2], 4
    %s13 = int_to_ptr.vmem [resolvable:$true] %s12
    %15 = dma.hbm_to_vmem [thread:$0]  %s10, 1536, %s13, [#allocation3], 256, 256, 12
    %s16 = smul.u32 8, 12
    %s17 = smul.u32 %s16, 1
    %s18 = sshll.u32 %s17, 4
    %19 = dma.done [#allocation3], %s18
    %v20 = vld [vmem:[#allocation2] sm:$0xff]
    %v21 = vld [vmem:[#allocation2 + $0x8] sm:$0xf]
    %v22 = vld [vmem:[#allocation2 + $0x10] sm:$0xff]
    %v23 = vld [vmem:[#allocation2 + $0x18] sm:$0xf]
    %v24 = vld [vmem:[#allocation2 + $0x20] sm:$0xff]
    %v25 = vld [vmem:[#allocation2 + $0x28] sm:$0xf]
    %v26 = vld [vmem:[#allocation2 + $0x30] sm:$0xff]
    %v27 = vld [vmem:[#allocation2 + $0x38] sm:$0xf]
    %v28 = vld [vmem:[#allocation2 + $0x40] sm:$0xff]
    %v29 = vld [vmem:[#allocation2 + $0x48] sm:$0xf]
    %v30 = vld [vmem:[#allocation2 + $0x50] sm:$0xff]
    %v31 = vld [vmem:[#allocation2 + $0x58] sm:$0xf]
    %v32 = vld [vmem:[#allocation2 + $0x60] sm:$0xff]
    %v33 = vld [vmem:[#allocation2 + $0x68] sm:$0xf]
    %v34 = vld [vmem:[#allocation2 + $0x70] sm:$0xff]
    %v35 = vld [vmem:[#allocation2 + $0x78] sm:$0xf]
    %vm36 = vcmask 97280
    %37 = vst.msk [vmem:[#allocation4] sm:$0xff] %vm36, %v20
    %vm38 = vcmask 93184
    %39 = vst.msk [vmem:[#allocation4 + $0x8] sm:$0xf] %vm38, %v21
    %40 = vst.msk [vmem:[#allocation4 + $0x10] sm:$0xff] %vm36, %v22
    %41 = vst.msk [vmem:[#allocation4 + $0x18] sm:$0xf] %vm38, %v23
    %42 = vst.msk [vmem:[#allocation4 + $0x20] sm:$0xff] %vm36, %v24
    %43 = vst.msk [vmem:[#allocation4 + $0x28] sm:$0xf] %vm38, %v25
    %44 = vst.msk [vmem:[#allocation4 + $0x30] sm:$0xff] %vm36, %v26
    %45 = vst.msk [vmem:[#allocation4 + $0x38] sm:$0xf] %vm38, %v27
    %46 = vst.msk [vmem:[#allocation4 + $0x40] sm:$0xff] %vm36, %v28
    %47 = vst.msk [vmem:[#allocation4 + $0x48] sm:$0xf] %vm38, %v29
    %48 = vst.msk [vmem:[#allocation4 + $0x50] sm:$0xff] %vm36, %v30
    %49 = vst.msk [vmem:[#allocation4 + $0x58] sm:$0xf] %vm38, %v31
    %50 = vst.msk [vmem:[#allocation4 + $0x60] sm:$0xff] %vm36, %v32
    %51 = vst.msk [vmem:[#allocation4 + $0x68] sm:$0xf] %vm38, %v33
    %52 = vst.msk [vmem:[#allocation4 + $0x70] sm:$0xff] %vm36, %v34
    %53 = vst.msk [vmem:[#allocation4 + $0x78] sm:$0xf] %vm38, %v35
    // Predicated region
    $region2: #{tpu_custom_call.1} parent=1 // pred_check
      _
    $region3: #{tpu_custom_call.1} parent=1 // pred_check_branch
      %55 = sbr.rel (0) target = $region5
    $region4: #{tpu_custom_call.1} parent=1 // pred_region
      %s57 = ssub.s32 2048, 2048
      %58 = vsyncadd [#allocation5], %s57
      %s59 = sshll.u32 [#allocation4], 4
      %s60 = int_to_ptr.vmem [resolvable:$true] %s59
      %65 = dma.vmem_to_hbm [thread:$0]  %s60, 2048, %s1, [#allocation5], 128, 128, 8
    $region5: #{tpu_custom_call.1} parent=1 // pred_fallthru
      _
    // Predicated region
    $region6: #{tpu_custom_call.1} parent=1 // pred_check
      _
    $region7: #{tpu_custom_call.1} parent=1 // pred_check_branch
      %67 = sbr.rel (0) target = $region9
    $region8: #{tpu_custom_call.1} parent=1 // pred_region
      %68 = dma.done [#allocation5], 2048
    $region9: #{tpu_custom_call.1} parent=1 // pred_fallthru
      _
    %69 = vsyncpa [#allocation5], 1
  %70 = vsyncmov [#allocation3]
  %s71 = vpop.sfrf %70
  %p72 = scmp.eq.s32.totalorder %s71, 0
  %p73 = pneg %p72
  %75 = shalt.err (%p73)

</llo_original>
